<compile_context>
chip_gen: v6e
topology: v6e:2x2x1
jax: 0.10.0
libtpu: 0.0.40
codegen_flags: <defaults>
</compile_context>

<pallas_src>
import math

import jax
import jax.numpy as jnp
import numpy as np
from jax.experimental import pallas as pl
from jax.experimental.pallas import tpu as pltpu


_GELU_C0 = 0.7978845608028654   # sqrt(2/pi)
_GELU_C1 = 0.044715


def _ffn_kernel(x_ref, w1_ref, b1_ref, w2_ref, b2_ref, o_ref, acc_ref):
    j = pl.program_id(1)

    @pl.when(j == 0)
    def _init():
        acc_ref[...] = jnp.zeros_like(acc_ref)

    cdtype = w1_ref.dtype                              # MXU input dtype (bf16 fast path)
    x = x_ref[...].astype(cdtype)                      # (bm, d_model)

    # First Linear restricted to this d_intermediate tile; f32 accumulation.
    h = jnp.dot(x, w1_ref[...], preferred_element_type=jnp.float32)
    h = h + b1_ref[...]                                # (1, tn) broadcasts over rows

    # tanh-approx GELU (identical to the PyTorch gelu_fn), kept in f32.
    h = 0.5 * h * (1.0 + jnp.tanh(_GELU_C0 * (h + _GELU_C1 * (h * h * h))))

    # Second Linear: fold this tile's contribution into the f32 accumulator.
    acc_ref[...] += jnp.dot(h.astype(cdtype), w2_ref[...],
                            preferred_element_type=jnp.float32)

    @pl.when(j == pl.num_programs(1) - 1)
    def _finalize():
        o_ref[...] = (acc_ref[...] + b2_ref[...]).astype(o_ref.dtype)


def _vmem_capacity_bytes():
    try:
        return int(pltpu.get_tpu_info().vmem_capacity_bytes)
    except Exception:
        return 128 * 1024 * 1024


def ffn(x, w1, b1, w2, b2, *, block_m=None, tile_n=None,
        matmul_dtype=jnp.bfloat16, single_buffer_resident=True):
    """Fused FFN forward.

    x: (..., d_model); w1: (d_model, d_int); b1: (d_int,);
    w2: (d_int, d_model); b2: (d_model,).  Returns same shape/dtype as x.
    """
    orig_shape = x.shape
    d_model, d_int = w1.shape

    x2 = x.reshape(-1, d_model)
    M = x2.shape[0]

    vmem_cap = _vmem_capacity_bytes()
    small_vmem = vmem_cap <= 96 * 1024 * 1024          # v7x-class (64 MiB / TC)

    if block_m is None:
        block_m = 256 if small_vmem else 512
    if tile_n is None:
        tile_n = 256 if small_vmem else 512

    # Row tile: full M if small, else block_m (8-aligned).  A partial final row
    # tile is fine: Pallas clips the DMA and masks the writeback, and rows are
    # independent, so padding rows never pollute valid rows.  No jnp.pad of x.
    bm = M if M <= block_m else block_m
    n_m = pl.cdiv(M, bm)

    # d_intermediate tile (contraction of the 2nd matmul) must divide the padded
    # extent exactly -> pad the (parameter-sized) weights with zeros if needed.
    tn = d_int if d_int <= tile_n else tile_n
    n_j = pl.cdiv(d_int, tn)
    d_int_p = n_j * tn
    if d_int_p != d_int:
        pad = d_int_p - d_int
        w1 = jnp.pad(w1, ((0, 0), (0, pad)))
        b1 = jnp.pad(b1, ((0, pad),))
        w2 = jnp.pad(w2, ((0, pad), (0, 0)))

    if matmul_dtype is not None:
        w1 = w1.astype(matmul_dtype)
        w2 = w2.astype(matmul_dtype)

    b1_2d = b1.reshape(1, d_int_p).astype(jnp.float32)
    b2_2d = b2.reshape(1, d_model).astype(jnp.float32)

    # Single-buffer operands whose block index is constant along the streamed
    # d_intermediate axis (their second pipeline buffer is pure wasted VMEM).
    resident = ({"pipeline_mode": pl.Buffered(1)}
                if single_buffer_resident else {})

    grid_spec = pltpu.PrefetchScalarGridSpec(
        num_scalar_prefetch=0,
        grid=(n_m, n_j),                                                   # reduction last
        in_specs=[
            pl.BlockSpec((bm, d_model), lambda i, j: (i, 0), **resident),  # x row tile
            pl.BlockSpec((d_model, tn), lambda i, j: (0, j)),              # W1 col tile
            pl.BlockSpec((1, tn),       lambda i, j: (0, j)),              # b1 tile
            pl.BlockSpec((tn, d_model), lambda i, j: (j, 0)),              # W2 row tile
            pl.BlockSpec((1, d_model),  lambda i, j: (0, 0), **resident),  # b2
        ],
        out_specs=pl.BlockSpec((bm, d_model), lambda i, j: (i, 0)),
        scratch_shapes=[pltpu.VMEM((bm, d_model), jnp.float32)],
    )

    out = pl.pallas_call(
        _ffn_kernel,
        out_shape=jax.ShapeDtypeStruct((M, d_model), x.dtype),
        grid_spec=grid_spec,
        compiler_params=pltpu.CompilerParams(
            dimension_semantics=("parallel", "arbitrary"),
            vmem_limit_bytes=int(min(vmem_cap * 3 // 4, 100 * 1024 * 1024)),
        ),
    )(x2, w1, b1_2d, w2, b2_2d)

    return out.reshape(orig_shape)


def _ffn_reference(x, w1, b1, w2, b2):
    """Plain-JAX replica of the PyTorch FFN forward (for verification)."""
    h = x @ w1 + b1
    h = 0.5 * h * (1.0 + jnp.tanh(_GELU_C0 * (h + _GELU_C1 * h ** 3)))
    return h @ w2 + b2


if __name__ == "__main__":
    B, S = 2, 8
    d_model, d_intermediate = 128, 256

    key = jax.random.PRNGKey(0)
    kx, kw1, kb1, kw2, kb2 = jax.random.split(key, 5)

    x = jax.random.normal(kx, (B, S, d_model), dtype=jnp.float32)

    # PyTorch-Linear-like uniform init, stored pre-transposed for `x @ W`.
    s1 = 1.0 / math.sqrt(d_model)
    w1 = jax.random.uniform(kw1, (d_model, d_intermediate), jnp.float32, -s1, s1)
    b1 = jax.random.uniform(kb1, (d_intermediate,), jnp.float32, -s1, s1)
    s2 = 1.0 / math.sqrt(d_intermediate)
    w2 = jax.random.uniform(kw2, (d_intermediate, d_model), jnp.float32, -s2, s2)
    b2 = jax.random.uniform(kb2, (d_model,), jnp.float32, -s2, s2)

    # Small tiles so both grid axes (2 row tiles x 2 streamed d_int tiles) and
    # the accumulator init/finalize phases are exercised at this tiny shape.
    test_tiles = dict(block_m=8, tile_n=128)

    def run(**kw):
        try:
            return jax.block_until_ready(ffn(x, w1, b1, w2, b2, **test_tiles, **kw))
        except Exception:
            # Fallback if pipeline_mode=pl.Buffered(1) is unsupported in this build.
            return jax.block_until_ready(
                ffn(x, w1, b1, w2, b2, single_buffer_resident=False,
                    **test_tiles, **kw))

    ref = _ffn_reference(x, w1, b1, w2, b2)

    # Fast path: bf16 MXU inputs + f32 accumulation (~1e-2 relative agreement).
    out_bf16 = run()
    np.testing.assert_allclose(np.asarray(out_bf16), np.asarray(ref),
                               rtol=2e-2, atol=2e-2)

    # Exact-f32 path at tight tolerance (matches PyTorch numerics).
    out_f32 = run(matmul_dtype=jnp.float32)
    np.testing.assert_allclose(np.asarray(out_f32), np.asarray(ref),
                               rtol=1e-5, atol=1e-5)

    print("KERNEL_OK")
</pallas_src>

<mosaic_0001>
module attributes {stable_mosaic.version = 11 : i64} {
  func.func @_ffn_kernel(%arg0: i32, %arg1: i32, %arg2: memref<8x128xf32, #tpu.memory_space<vmem>>, %arg3: memref<128x128xbf16, #tpu.memory_space<vmem>>, %arg4: memref<1x128xf32, #tpu.memory_space<vmem>>, %arg5: memref<128x128xbf16, #tpu.memory_space<vmem>>, %arg6: memref<1x128xf32, #tpu.memory_space<vmem>>, %arg7: memref<8x128xf32, #tpu.memory_space<vmem>>, %arg8: memref<8x128xf32, #tpu.memory_space<vmem>>) attributes {dimension_semantics = [#tpu.dimension_semantics<parallel>, #tpu.dimension_semantics<arbitrary>], iteration_bounds = array<i64: 2, 2>, scalar_prefetch = 0 : i64, scratch_operands = 1 : i64, tpu.core_type = #tpu.core_type<tc>, window_params = [{pipeline_mode = #tpu.pipeline_mode<synchronous>, transform_indices = @transform_0, window_bounds = array<i64: 8, 128>}, {transform_indices = @transform_1, window_bounds = array<i64: 128, 128>}, {transform_indices = @transform_2, window_bounds = array<i64: 1, 128>}, {transform_indices = @transform_3, window_bounds = array<i64: 128, 128>}, {pipeline_mode = #tpu.pipeline_mode<synchronous>, transform_indices = @transform_4, window_bounds = array<i64: 1, 128>}, {transform_indices = @transform_5, window_bounds = array<i64: 8, 128>}]} {
    %c0_i32 = arith.constant 0 : i32
    %0 = arith.cmpi eq, %arg1, %c0_i32 : i32
    %1 = arith.extui %0 : i1 to i32
    %c0_i32_0 = arith.constant 0 : i32
    %2 = arith.cmpi ne, %1, %c0_i32_0 : i32
    scf.if %2 {
      %cst_18 = arith.constant 0.000000e+00 : f32
      %32 = vector.broadcast %cst_18 : f32 to vector<8x128xf32>
      %c0_19 = arith.constant 0 : index
      %c0_20 = arith.constant 0 : index
      %33 = vector.load %arg8[%c0_19, %c0_20] : memref<8x128xf32, #tpu.memory_space<vmem>>, vector<8x128xf32>
      tpu.vector_store %arg8[%c0_19, %c0_20], %32 {strides = array<i32>} : memref<8x128xf32, #tpu.memory_space<vmem>>, vector<8x128xf32>,
    } else {
    }
    %c0 = arith.constant 0 : index
    %c0_1 = arith.constant 0 : index
    %3 = vector.load %arg2[%c0, %c0_1] : memref<8x128xf32, #tpu.memory_space<vmem>>, vector<8x128xf32>
    %4 = arith.truncf %3 : vector<8x128xf32> to vector<8x128xbf16>
    %c0_2 = arith.constant 0 : index
    %c0_3 = arith.constant 0 : index
    %5 = vector.load %arg3[%c0_2, %c0_3] : memref<128x128xbf16, #tpu.memory_space<vmem>>, vector<128x128xbf16>
    %cst = arith.constant dense<0.000000e+00> : vector<8x128xf32>
    %6 = tpu.matmul %4, %5, %cst {dimension_numbers = #tpu.dot_dimension_numbers<[1], [0], [0], [1], [0, 0, 1, 1], [], []>} : vector<8x128xbf16>, vector<128x128xbf16>, vector<8x128xf32> -> vector<8x128xf32>
    %c0_4 = arith.constant 0 : index
    %c0_5 = arith.constant 0 : index
    %7 = vector.load %arg4[%c0_4, %c0_5] : memref<1x128xf32, #tpu.memory_space<vmem>>, vector<1x128xf32>
    %8 = vector.broadcast %7 : vector<1x128xf32> to vector<8x128xf32>
    %9 = arith.addf %6, %8 : vector<8x128xf32>
    %cst_6 = arith.constant 5.000000e-01 : f32
    %10 = vector.broadcast %cst_6 : f32 to vector<8x128xf32>
    %11 = arith.mulf %10, %9 : vector<8x128xf32>
    %12 = arith.mulf %9, %9 : vector<8x128xf32>
    %13 = arith.mulf %12, %9 : vector<8x128xf32>
    %cst_7 = arith.constant 4.471500e-02 : f32
    %14 = vector.broadcast %cst_7 : f32 to vector<8x128xf32>
    %15 = arith.mulf %14, %13 : vector<8x128xf32>
    %16 = arith.addf %9, %15 : vector<8x128xf32>
    %cst_8 = arith.constant 0.797884583 : f32
    %17 = vector.broadcast %cst_8 : f32 to vector<8x128xf32>
    %18 = arith.mulf %17, %16 : vector<8x128xf32>
    %19 = math.tanh %18 : vector<8x128xf32>
    %cst_9 = arith.constant 1.000000e+00 : f32
    %20 = vector.broadcast %cst_9 : f32 to vector<8x128xf32>
    %21 = arith.addf %20, %19 : vector<8x128xf32>
    %22 = arith.mulf %11, %21 : vector<8x128xf32>
    %c0_10 = arith.constant 0 : index
    %c0_11 = arith.constant 0 : index
    %23 = vector.load %arg8[%c0_10, %c0_11] : memref<8x128xf32, #tpu.memory_space<vmem>>, vector<8x128xf32>
    %24 = arith.truncf %22 : vector<8x128xf32> to vector<8x128xbf16>
    %c0_12 = arith.constant 0 : index
    %c0_13 = arith.constant 0 : index
    %25 = vector.load %arg5[%c0_12, %c0_13] : memref<128x128xbf16, #tpu.memory_space<vmem>>, vector<128x128xbf16>
    %cst_14 = arith.constant dense<0.000000e+00> : vector<8x128xf32>
    %26 = tpu.matmul %24, %25, %cst_14 {dimension_numbers = #tpu.dot_dimension_numbers<[1], [0], [0], [1], [0, 0, 1, 1], [], []>} : vector<8x128xbf16>, vector<128x128xbf16>, vector<8x128xf32> -> vector<8x128xf32>
    %27 = arith.addf %23, %26 : vector<8x128xf32>
    %c0_15 = arith.constant 0 : index
    %c0_16 = arith.constant 0 : index
    %28 = vector.load %arg8[%c0_15, %c0_16] : memref<8x128xf32, #tpu.memory_space<vmem>>, vector<8x128xf32>
    tpu.vector_store %arg8[%c0_15, %c0_16], %27 {strides = array<i32>} : memref<8x128xf32, #tpu.memory_space<vmem>>, vector<8x128xf32>,
    %c1_i32 = arith.constant 1 : i32
    %29 = arith.cmpi eq, %arg1, %c1_i32 : i32
    %30 = arith.extui %29 : i1 to i32
    %c0_i32_17 = arith.constant 0 : i32
    %31 = arith.cmpi ne, %30, %c0_i32_17 : i32
    scf.if %31 {
      %c0_18 = arith.constant 0 : index
      %c0_19 = arith.constant 0 : index
      %32 = vector.load %arg8[%c0_18, %c0_19] : memref<8x128xf32, #tpu.memory_space<vmem>>, vector<8x128xf32>
      %c0_20 = arith.constant 0 : index
      %c0_21 = arith.constant 0 : index
      %33 = vector.load %arg6[%c0_20, %c0_21] : memref<1x128xf32, #tpu.memory_space<vmem>>, vector<1x128xf32>
      %34 = vector.broadcast %33 : vector<1x128xf32> to vector<8x128xf32>
      %35 = arith.addf %32, %34 : vector<8x128xf32>
      %c0_22 = arith.constant 0 : index
      %c0_23 = arith.constant 0 : index
      %36 = vector.load %arg7[%c0_22, %c0_23] : memref<8x128xf32, #tpu.memory_space<vmem>>, vector<8x128xf32>
      tpu.vector_store %arg7[%c0_22, %c0_23], %35 {strides = array<i32>} : memref<8x128xf32, #tpu.memory_space<vmem>>, vector<8x128xf32>,
    } else {
    }
    return
  }
  func.func @transform_0(%arg0: i32, %arg1: i32) -> (i32, i32) {
    %c0_i32 = arith.constant 0 : i32
    %c0_i32_0 = arith.constant 0 : i32
    return %arg0, %c0_i32 : i32, i32
  }
  func.func @transform_1(%arg0: i32, %arg1: i32) -> (i32, i32) {
    %c0_i32 = arith.constant 0 : i32
    %c0_i32_0 = arith.constant 0 : i32
    return %c0_i32, %arg1 : i32, i32
  }
  func.func @transform_2(%arg0: i32, %arg1: i32) -> (i32, i32) {
    %c0_i32 = arith.constant 0 : i32
    %c0_i32_0 = arith.constant 0 : i32
    return %c0_i32, %arg1 : i32, i32
  }
  func.func @transform_3(%arg0: i32, %arg1: i32) -> (i32, i32) {
    %c0_i32 = arith.constant 0 : i32
    %c0_i32_0 = arith.constant 0 : i32
    return %arg1, %c0_i32 : i32, i32
  }
  func.func @transform_4(%arg0: i32, %arg1: i32) -> (i32, i32) {
    %c0_i32 = arith.constant 0 : i32
    %c0_i32_0 = arith.constant 0 : i32
    %c0_i32_1 = arith.constant 0 : i32
    return %c0_i32, %c0_i32_0 : i32, i32
  }
  func.func @transform_5(%arg0: i32, %arg1: i32) -> (i32, i32) {
    %c0_i32 = arith.constant 0 : i32
    %c0_i32_0 = arith.constant 0 : i32
    return %arg0, %c0_i32 : i32, i32
  }
}

module attributes {stable_mosaic.version = 11 : i64} {
  func.func @_ffn_kernel(%arg0: i32, %arg1: i32, %arg2: memref<8x128xf32, #tpu.memory_space<vmem>>, %arg3: memref<128x128xbf16, #tpu.memory_space<vmem>>, %arg4: memref<1x128xf32, #tpu.memory_space<vmem>>, %arg5: memref<128x128xbf16, #tpu.memory_space<vmem>>, %arg6: memref<1x128xf32, #tpu.memory_space<vmem>>, %arg7: memref<8x128xf32, #tpu.memory_space<vmem>>, %arg8: memref<8x128xf32, #tpu.memory_space<vmem>>) attributes {dimension_semantics = [#tpu.dimension_semantics<parallel>, #tpu.dimension_semantics<arbitrary>], iteration_bounds = array<i64: 2, 2>, scalar_prefetch = 0 : i64, scratch_operands = 1 : i64, tpu.core_type = #tpu.core_type<tc>, window_params = [{transform_indices = @transform_0, window_bounds = array<i64: 8, 128>}, {transform_indices = @transform_1, window_bounds = array<i64: 128, 128>}, {transform_indices = @transform_2, window_bounds = array<i64: 1, 128>}, {transform_indices = @transform_3, window_bounds = array<i64: 128, 128>}, {pipeline_mode = #tpu.pipeline_mode<synchronous>, transform_indices = @transform_4, window_bounds = array<i64: 1, 128>}, {transform_indices = @transform_5, window_bounds = array<i64: 8, 128>}]} {
    %c0_i32 = arith.constant 0 : i32
    %0 = arith.cmpi eq, %arg1, %c0_i32 : i32
    %1 = arith.extui %0 : i1 to i32
    %c0_i32_0 = arith.constant 0 : i32
    %2 = arith.cmpi ne, %1, %c0_i32_0 : i32
    scf.if %2 {
      %cst_18 = arith.constant 0.000000e+00 : f32
      %32 = vector.broadcast %cst_18 : f32 to vector<8x128xf32>
      %c0_19 = arith.constant 0 : index
      %c0_20 = arith.constant 0 : index
      %33 = vector.load %arg8[%c0_19, %c0_20] : memref<8x128xf32, #tpu.memory_space<vmem>>, vector<8x128xf32>
      tpu.vector_store %arg8[%c0_19, %c0_20], %32 {strides = array<i32>} : memref<8x128xf32, #tpu.memory_space<vmem>>, vector<8x128xf32>,
    } else {
    }
    %c0 = arith.constant 0 : index
    %c0_1 = arith.constant 0 : index
    %3 = vector.load %arg2[%c0, %c0_1] : memref<8x128xf32, #tpu.memory_space<vmem>>, vector<8x128xf32>
    %4 = arith.truncf %3 : vector<8x128xf32> to vector<8x128xbf16>
    %c0_2 = arith.constant 0 : index
    %c0_3 = arith.constant 0 : index
    %5 = vector.load %arg3[%c0_2, %c0_3] : memref<128x128xbf16, #tpu.memory_space<vmem>>, vector<128x128xbf16>
    %cst = arith.constant dense<0.000000e+00> : vector<8x128xf32>
    %6 = tpu.matmul %4, %5, %cst {dimension_numbers = #tpu.dot_dimension_numbers<[1], [0], [0], [1], [0, 0, 1, 1], [], []>} : vector<8x128xbf16>, vector<128x128xbf16>, vector<8x128xf32> -> vector<8x128xf32>
    %c0_4 = arith.constant 0 : index
    %c0_5 = arith.constant 0 : index
    %7 = vector.load %arg4[%c0_4, %c0_5] : memref<1x128xf32, #tpu.memory_space<vmem>>, vector<1x128xf32>
    %8 = vector.broadcast %7 : vector<1x128xf32> to vector<8x128xf32>
    %9 = arith.addf %6, %8 : vector<8x128xf32>
    %cst_6 = arith.constant 5.000000e-01 : f32
    %10 = vector.broadcast %cst_6 : f32 to vector<8x128xf32>
    %11 = arith.mulf %10, %9 : vector<8x128xf32>
    %12 = arith.mulf %9, %9 : vector<8x128xf32>
    %13 = arith.mulf %12, %9 : vector<8x128xf32>
    %cst_7 = arith.constant 4.471500e-02 : f32
    %14 = vector.broadcast %cst_7 : f32 to vector<8x128xf32>
    %15 = arith.mulf %14, %13 : vector<8x128xf32>
    %16 = arith.addf %9, %15 : vector<8x128xf32>
    %cst_8 = arith.constant 0.797884583 : f32
    %17 = vector.broadcast %cst_8 : f32 to vector<8x128xf32>
    %18 = arith.mulf %17, %16 : vector<8x128xf32>
    %19 = math.tanh %18 : vector<8x128xf32>
    %cst_9 = arith.constant 1.000000e+00 : f32
    %20 = vector.broadcast %cst_9 : f32 to vector<8x128xf32>
    %21 = arith.addf %20, %19 : vector<8x128xf32>
    %22 = arith.mulf %11, %21 : vector<8x128xf32>
    %c0_10 = arith.constant 0 : index
    %c0_11 = arith.constant 0 : index
    %23 = vector.load %arg8[%c0_10, %c0_11] : memref<8x128xf32, #tpu.memory_space<vmem>>, vector<8x128xf32>
    %24 = arith.truncf %22 : vector<8x128xf32> to vector<8x128xbf16>
    %c0_12 = arith.constant 0 : index
    %c0_13 = arith.constant 0 : index
    %25 = vector.load %arg5[%c0_12, %c0_13] : memref<128x128xbf16, #tpu.memory_space<vmem>>, vector<128x128xbf16>
    %cst_14 = arith.constant dense<0.000000e+00> : vector<8x128xf32>
    %26 = tpu.matmul %24, %25, %cst_14 {dimension_numbers = #tpu.dot_dimension_numbers<[1], [0], [0], [1], [0, 0, 1, 1], [], []>} : vector<8x128xbf16>, vector<128x128xbf16>, vector<8x128xf32> -> vector<8x128xf32>
    %27 = arith.addf %23, %26 : vector<8x128xf32>
    %c0_15 = arith.constant 0 : index
    %c0_16 = arith.constant 0 : index
    %28 = vector.load %arg8[%c0_15, %c0_16] : memref<8x128xf32, #tpu.memory_space<vmem>>, vector<8x128xf32>
    tpu.vector_store %arg8[%c0_15, %c0_16], %27 {strides = array<i32>} : memref<8x128xf32, #tpu.memory_space<vmem>>, vector<8x128xf32>,
    %c1_i32 = arith.constant 1 : i32
    %29 = arith.cmpi eq, %arg1, %c1_i32 : i32
    %30 = arith.extui %29 : i1 to i32
    %c0_i32_17 = arith.constant 0 : i32
    %31 = arith.cmpi ne, %30, %c0_i32_17 : i32
    scf.if %31 {
      %c0_18 = arith.constant 0 : index
      %c0_19 = arith.constant 0 : index
      %32 = vector.load %arg8[%c0_18, %c0_19] : memref<8x128xf32, #tpu.memory_space<vmem>>, vector<8x128xf32>
      %c0_20 = arith.constant 0 : index
      %c0_21 = arith.constant 0 : index
      %33 = vector.load %arg6[%c0_20, %c0_21] : memref<1x128xf32, #tpu.memory_space<vmem>>, vector<1x128xf32>
      %34 = vector.broadcast %33 : vector<1x128xf32> to vector<8x128xf32>
      %35 = arith.addf %32, %34 : vector<8x128xf32>
      %c0_22 = arith.constant 0 : index
      %c0_23 = arith.constant 0 : index
      %36 = vector.load %arg7[%c0_22, %c0_23] : memref<8x128xf32, #tpu.memory_space<vmem>>, vector<8x128xf32>
      tpu.vector_store %arg7[%c0_22, %c0_23], %35 {strides = array<i32>} : memref<8x128xf32, #tpu.memory_space<vmem>>, vector<8x128xf32>,
    } else {
    }
    return
  }
  func.func @transform_0(%arg0: i32, %arg1: i32) -> (i32, i32) {
    %c0_i32 = arith.constant 0 : i32
    %c0_i32_0 = arith.constant 0 : i32
    return %arg0, %c0_i32 : i32, i32
  }
  func.func @transform_1(%arg0: i32, %arg1: i32) -> (i32, i32) {
    %c0_i32 = arith.constant 0 : i32
    %c0_i32_0 = arith.constant 0 : i32
    return %c0_i32, %arg1 : i32, i32
  }
  func.func @transform_2(%arg0: i32, %arg1: i32) -> (i32, i32) {
    %c0_i32 = arith.constant 0 : i32
    %c0_i32_0 = arith.constant 0 : i32
    return %c0_i32, %arg1 : i32, i32
  }
  func.func @transform_3(%arg0: i32, %arg1: i32) -> (i32, i32) {
    %c0_i32 = arith.constant 0 : i32
    %c0_i32_0 = arith.constant 0 : i32
    return %arg1, %c0_i32 : i32, i32
  }
  func.func @transform_4(%arg0: i32, %arg1: i32) -> (i32, i32) {
    %c0_i32 = arith.constant 0 : i32
    %c0_i32_0 = arith.constant 0 : i32
    %c0_i32_1 = arith.constant 0 : i32
    return %c0_i32, %c0_i32_0 : i32, i32
  }
  func.func @transform_5(%arg0: i32, %arg1: i32) -> (i32, i32) {
    %c0_i32 = arith.constant 0 : i32
    %c0_i32_0 = arith.constant 0 : i32
    return %arg0, %c0_i32 : i32, i32
  }
}

</mosaic_0001>

<llo_original>
// kernel: tpu_custom_call.1
$region0: #{tpu_custom_call.1}
  #allocation0 [shape = 'u32[]', space=smem, size = 0x4, offset = 0x4, fixed_abs, tag = 'smem constant byte address 0x4 - core index']
  #allocation1 [shape = 'u32[144,128]{1,0:T(1,128)}', space=vmem, size = 0x12000, scoped, tag = 'internal scratch']
  #allocation2 [shape = 'f32[8,128]{1,0:T(8,128)}', space=vmem, size = 0x1000, scoped, tag = 'scratch operand']
  %s0 = inlined_call_operand.hbm [shape: f32[16,128], index: 0, kind: input, shape index: {}]
  %s1 = inlined_call_operand.hbm [shape: bf16[128,256], index: 1, kind: input, shape index: {}]
  %s2 = inlined_call_operand.vmem [shape: f32[1,256], index: 2, kind: input, shape index: {}]
  %s3 = inlined_call_operand.hbm [shape: bf16[256,128], index: 3, kind: input, shape index: {}]
  %s4 = inlined_call_operand.vmem [shape: f32[1,128], index: 4, kind: input, shape index: {}]
  %s5 = inlined_call_operand.hbm [shape: f32[16,128], index: 5, kind: output, shape index: {}]
  %s6 = sld [smem:[#allocation0]]
  $region73: #{tpu_custom_call.1} parent=0
    _
  %s8 = ssub.s32 1, %s6
  %s9 = scalar_select 0, %s8, %s6
  $region1: #{tpu_custom_call.1} parent=0
    #allocation3 [shape = 'u8[4096]{0}', space=vmem, size = 0x1000, scoped, tag = 'input window, operand 0, single buffered']
    #allocation4 [shape = 's32[2]{0}', space=sflag, size = 0x8, scoped, tag = 'scoped memory for tpu_custom_call.1']
    #allocation5 [shape = 's32[2]{0}', space=sflag, size = 0x8, scoped, tag = 'scoped memory for tpu_custom_call.1']
    #allocation6 [shape = 'u8[65536]{0}', space=vmem, size = 0x10000, scoped, tag = 'input window, operand 1']
    #allocation7 [shape = 's32[2]{0}', space=sflag, size = 0x8, scoped, tag = 'scoped memory for tpu_custom_call.1']
    #allocation8 [shape = 'u8[65536]{0}', space=vmem, size = 0x10000, scoped, tag = 'input window, operand 3']
    #allocation9 [shape = 'u8[8192]{0}', space=vmem, size = 0x2000, scoped, tag = 'output window, operand 0']
    %10 = vsyncpa [#allocation4], 0
    %11 = vsyncpa [#allocation7], 0
    %s12 = scalar_lea.sflag [#allocation7], 1
    %13 = vsyncpa %s12, 0
    %14 = vsyncpa [#allocation5], 0
    %s15 = scalar_lea.sflag [#allocation5], 1
    %16 = vsyncpa %s15, 0
    loop: start=0, step=1, limit=6
    $region2: #{tpu_custom_call.1} parent=1 // loop_pre_header
      _
    $region3: #{tpu_custom_call.1} parent=1 // loop_header
      %s18 = sphi 0, %s22
      %p19 = scmp.ge.s32.totalorder %s18, 6
      %s25 = sphi 0, %s37
      %s26 = sphi 0, %s33
      %s27 = sphi 0, %s25
      %s28 = sphi 0, %s26
      %s29 = sphi 0, %s27
      %s30 = sphi 0, %s28
      %s40 = sphi 0, %s42
      %s43 = sphi 0, %s40
      %s44 = sphi 0, %s43
      %s60 = sphi 0, %s44
      %s66 = sphi 0, %s68
      %s69 = sphi 0, %s66
      %s70 = sphi 0, %s69
      %s86 = sphi 0, %s70
      %s92 = sphi 0, %s94
      %s95 = sphi 0, %s92
      %s96 = sphi 0, %s95
      %s112 = sphi 0, %s96
      %s118 = sphi 0, %s120
      %s121 = sphi 0, %s118
      %s122 = sphi 0, %s121
      %s138 = sphi 0, %s122
      %s142 = sphi 0, %s142
      %s144 = sphi 0, %s142
      %s145 = sphi 0, %s144
      %s159 = sphi 0, %s145
      %s165 = sphi 0, %s167
      %s168 = sphi 0, %s165
      %s169 = sphi 0, %s168
      %s185 = sphi 0, %s169
    $region4: #{tpu_custom_call.1} parent=1 // loop_header_branch
      %21 = sbr.rel (%p19) target = $region8
    $region5: #{tpu_custom_call.1} parent=1 // loop_body
      %s23 = ssub.s32 %s18, 1
      %s24 = ssub.s32 %s18, 2
      %s31 = sadd.s32 1, %s26
      %p32 = scmp.ge.s32.totalorder %s31, 2
      %s33 = scalar_select %p32, 0, %s31
      %s34 = sadd.s32 1, %s25
      %s35 = scalar_select %p32, %s34, %s25
      %p36 = scmp.ge.s32.totalorder %s35, 2
      %s37 = scalar_select %p36, 0, %s35
      %s38 = ssub.s32 %s25, %s37
      %p39 = scmp.eq.s32.totalorder %s38, 0
      %s41 = sadd.s32 %s40, 1
      %s42 = scalar_select %p39, %s40, %s41
      %p45 = pneg %p39
      %p46 = scmp.eq.s32.totalorder %s18, 3
      %p47 = por %p45, %p46
      %p48 = scmp.ne.s32.totalorder %s40, %s43
      %p49 = scmp.eq.s32.totalorder %s18, 0
      %p50 = por %p48, %p49
      %p51 = scmp.ne.s32.totalorder %s40, %s43
      %p52 = scmp.eq.s32.totalorder %s23, 3
      %p53 = por %p51, %p52
      %p54 = scmp.ne.s32.totalorder %s43, %s44
      %p55 = scmp.eq.s32.totalorder %s23, 0
      %p56 = por %p54, %p55
      %p57 = scmp.ne.s32.totalorder %s43, %s44
      %p58 = scmp.eq.s32.totalorder %s24, 3
      %p59 = por %p57, %p58
      %p61 = scmp.ne.s32.totalorder %s44, %s60
      %p62 = scmp.eq.s32.totalorder %s24, 0
      %p63 = por %p61, %p62
      %s64 = ssub.s32 %s26, %s33
      %p65 = scmp.eq.s32.totalorder %s64, 0
      %s67 = sadd.s32 %s66, 1
      %s68 = scalar_select %p65, %s66, %s67
      %p71 = pneg %p65
      %p72 = scmp.eq.s32.totalorder %s18, 3
      %p73 = por %p71, %p72
      %p74 = scmp.ne.s32.totalorder %s66, %s69
      %p75 = scmp.eq.s32.totalorder %s18, 0
      %p76 = por %p74, %p75
      %p77 = scmp.ne.s32.totalorder %s66, %s69
      %p78 = scmp.eq.s32.totalorder %s23, 3
      %p79 = por %p77, %p78
      %p80 = scmp.ne.s32.totalorder %s69, %s70
      %p81 = scmp.eq.s32.totalorder %s23, 0
      %p82 = por %p80, %p81
      %p83 = scmp.ne.s32.totalorder %s69, %s70
      %p84 = scmp.eq.s32.totalorder %s24, 3
      %p85 = por %p83, %p84
      %p87 = scmp.ne.s32.totalorder %s70, %s86
      %p88 = scmp.eq.s32.totalorder %s24, 0
      %p89 = por %p87, %p88
      %s90 = ssub.s32 %s26, %s33
      %p91 = scmp.eq.s32.totalorder %s90, 0
      %s93 = sadd.s32 %s92, 1
      %s94 = scalar_select %p91, %s92, %s93
      %p97 = pneg %p91
      %p98 = scmp.eq.s32.totalorder %s18, 3
      %p99 = por %p97, %p98
      %p100 = scmp.ne.s32.totalorder %s92, %s95
      %p101 = scmp.eq.s32.totalorder %s18, 0
      %p102 = por %p100, %p101
      %p103 = scmp.ne.s32.totalorder %s92, %s95
      %p104 = scmp.eq.s32.totalorder %s23, 3
      %p105 = por %p103, %p104
      %p106 = scmp.ne.s32.totalorder %s95, %s96
      %p107 = scmp.eq.s32.totalorder %s23, 0
      %p108 = por %p106, %p107
      %p109 = scmp.ne.s32.totalorder %s95, %s96
      %p110 = scmp.eq.s32.totalorder %s24, 3
      %p111 = por %p109, %p110
      %p113 = scmp.ne.s32.totalorder %s96, %s112
      %p114 = scmp.eq.s32.totalorder %s24, 0
      %p115 = por %p113, %p114
      %s116 = ssub.s32 %s26, %s33
      %p117 = scmp.eq.s32.totalorder %s116, 0
      %s119 = sadd.s32 %s118, 1
      %s120 = scalar_select %p117, %s118, %s119
      %p123 = pneg %p117
      %p124 = scmp.eq.s32.totalorder %s18, 3
      %p125 = por %p123, %p124
      %p126 = scmp.ne.s32.totalorder %s118, %s121
      %p127 = scmp.eq.s32.totalorder %s18, 0
      %p128 = por %p126, %p127
      %p129 = scmp.ne.s32.totalorder %s118, %s121
      %p130 = scmp.eq.s32.totalorder %s23, 3
      %p131 = por %p129, %p130
      %p132 = scmp.ne.s32.totalorder %s121, %s122
      %p133 = scmp.eq.s32.totalorder %s23, 0
      %p134 = por %p132, %p133
      %p135 = scmp.ne.s32.totalorder %s121, %s122
      %p136 = scmp.eq.s32.totalorder %s24, 3
      %p137 = por %p135, %p136
      %p139 = scmp.ne.s32.totalorder %s122, %s138
      %p140 = scmp.eq.s32.totalorder %s24, 0
      %p141 = por %p139, %p140
      %s143 = sadd.s32 %s142, 1
      %p146 = scmp.eq.s32.totalorder %s18, 3
      %p147 = scmp.ne.s32.totalorder %s142, %s144
      %p148 = scmp.eq.s32.totalorder %s18, 0
      %p149 = por %p147, %p148
      %p150 = scmp.ne.s32.totalorder %s142, %s144
      %p151 = scmp.eq.s32.totalorder %s23, 3
      %p152 = por %p150, %p151
      %p153 = scmp.ne.s32.totalorder %s144, %s145
      %p154 = scmp.eq.s32.totalorder %s23, 0
      %p155 = por %p153, %p154
      %p156 = scmp.ne.s32.totalorder %s144, %s145
      %p157 = scmp.eq.s32.totalorder %s24, 3
      %p158 = por %p156, %p157
      %p160 = scmp.ne.s32.totalorder %s145, %s159
      %p161 = scmp.eq.s32.totalorder %s24, 0
      %p162 = por %p160, %p161
      %s163 = ssub.s32 %s25, %s37
      %p164 = scmp.eq.s32.totalorder %s163, 0
      %s166 = sadd.s32 %s165, 1
      %s167 = scalar_select %p164, %s165, %s166
      %p170 = pneg %p164
      %p171 = scmp.eq.s32.totalorder %s18, 3
      %p172 = por %p170, %p171
      %p173 = scmp.ne.s32.totalorder %s165, %s168
      %p174 = scmp.eq.s32.totalorder %s18, 0
      %p175 = por %p173, %p174
      %p176 = scmp.ne.s32.totalorder %s165, %s168
      %p177 = scmp.eq.s32.totalorder %s23, 3
      %p178 = por %p176, %p177
      %p179 = scmp.ne.s32.totalorder %s168, %s169
      %p180 = scmp.eq.s32.totalorder %s23, 0
      %p181 = por %p179, %p180
      %p182 = scmp.ne.s32.totalorder %s168, %s169
      %p183 = scmp.eq.s32.totalorder %s24, 3
      %p184 = por %p182, %p183
      %p186 = scmp.ne.s32.totalorder %s169, %s185
      %p187 = scmp.eq.s32.totalorder %s24, 0
      %p188 = por %p186, %p187
      %p189 = scmp.le.s32.totalorder 1, %s18
      %p190 = scmp.lt.s32.totalorder %s18, 5
      %p191 = pnand %p189, %p190
      %p192 = pneg %p191
      // Predicated region
      $region9: #{tpu_custom_call.1} parent=5 // pred_check
        _
      $region10: #{tpu_custom_call.1} parent=5 // pred_check_branch
        %194 = sbr.rel (%p191) target = $region12
      $region11: #{tpu_custom_call.1} parent=5 // pred_region
        %s195 = ssub.s32 %s18, 1
        // Predicated region
        $region13: #{tpu_custom_call.1} parent=11 // pred_check
          %p196 = pneg %p56
        $region14: #{tpu_custom_call.1} parent=11 // pred_check_branch
          %198 = sbr.rel (%p196) target = $region16
        $region15: #{tpu_custom_call.1} parent=11 // pred_region
          %s200 = ssub.s32 128, 128
          %201 = vsyncadd [#allocation4], %s200
          %s202 = smul.addr %s27, 128
          %s203 = scalar_lea.hbm %s0, %s202
          %s205 = sshll.u32 [#allocation3], 4
          %s206 = int_to_ptr.vmem [resolvable:$true] %s205
          %208 = dma.hbm_to_vmem [thread:$0]  %s203, 128, %s206, [#allocation4]
        $region16: #{tpu_custom_call.1} parent=11 // pred_fallthru
          _
        // Predicated region
        $region17: #{tpu_custom_call.1} parent=11 // pred_check
          %p209 = pneg %p155
        $region18: #{tpu_custom_call.1} parent=11 // pred_check_branch
          %211 = sbr.rel (%p209) target = $region20
        $region19: #{tpu_custom_call.1} parent=11 // pred_region
          _
        $region20: #{tpu_custom_call.1} parent=11 // pred_fallthru
          _
      $region12: #{tpu_custom_call.1} parent=5 // pred_fallthru
        _
      %p212 = scmp.lt.s32.totalorder %s18, 4
      // Predicated region
      $region21: #{tpu_custom_call.1} parent=5 // pred_check
        %p213 = pneg %p212
      $region22: #{tpu_custom_call.1} parent=5 // pred_check_branch
        %215 = sbr.rel (%p213) target = $region24
      $region23: #{tpu_custom_call.1} parent=5 // pred_region
        // Predicated region
        $region25: #{tpu_custom_call.1} parent=23 // pred_check
          %p216 = pneg %p76
        $region26: #{tpu_custom_call.1} parent=23 // pred_check_branch
          %218 = sbr.rel (%p216) target = $region28
        $region27: #{tpu_custom_call.1} parent=23 // pred_region
          %s219 = sand.u32 %s18, 1
          %s220 = scalar_lea.sflag [#allocation7], %s219
          %s221 = sand.u32 %s66, 1
          %s222 = smul.addr %s221, 64
          %s223 = scalar_lea.vmem [#allocation6], %s222
          %s225 = ssub.s32 1024, 1024
          %226 = vsyncadd %s220, %s225
          %s227 = smul.addr %s26, 64
          %s228 = scalar_lea.hbm %s1, %s227
          %s229 = sshll.u32 %s223, 4
          %s230 = int_to_ptr.vmem [resolvable:$true] %s229
          %235 = dma.hbm_to_vmem [thread:$0]  %s228, 1024, %s230, %s220, 128, 64, 4
        $region28: #{tpu_custom_call.1} parent=23 // pred_fallthru
          _
        // Predicated region
        $region29: #{tpu_custom_call.1} parent=23 // pred_check
          %p236 = pneg %p102
        $region30: #{tpu_custom_call.1} parent=23 // pred_check_branch
          %238 = sbr.rel (%p236) target = $region32
        $region31: #{tpu_custom_call.1} parent=23 // pred_region
          %p239 = scmp.lt.s32.totalorder %s26, 1
          %s240 = scalar_select %p239, %s26, 1
          %s241 = scalar_lea.vmem %s2, %s240
        $region32: #{tpu_custom_call.1} parent=23 // pred_fallthru
          _
        // Predicated region
        $region33: #{tpu_custom_call.1} parent=23 // pred_check
          %p242 = pneg %p128
        $region34: #{tpu_custom_call.1} parent=23 // pred_check_branch
          %244 = sbr.rel (%p242) target = $region36
        $region35: #{tpu_custom_call.1} parent=23 // pred_region
          %s245 = sand.u32 %s18, 1
          %s246 = scalar_lea.sflag [#allocation7], %s245
          %s247 = sand.u32 %s118, 1
          %s248 = smul.addr %s247, 64
          %s249 = scalar_lea.vmem [#allocation8], %s248
          %s250 = smul.u32 16, %s26
          %s252 = ssub.s32 1024, 1024
          %253 = vsyncadd %s246, %s252
          %s254 = smul.addr %s250, 64
          %s255 = scalar_lea.hbm %s3, %s254
          %s256 = sshll.u32 %s249, 4
          %s257 = int_to_ptr.vmem [resolvable:$true] %s256
          %262 = dma.hbm_to_vmem [thread:$0]  %s255, 1024, %s257, %s246, 64, 64, 4
        $region36: #{tpu_custom_call.1} parent=23 // pred_fallthru
          _
      $region24: #{tpu_custom_call.1} parent=5 // pred_fallthru
        _
      %p263 = scmp.le.s32.totalorder 1, %s18
      %p264 = scmp.lt.s32.totalorder %s18, 5
      %p265 = pnand %p263, %p264
      %p266 = pneg %p265
      // Predicated region
      $region37: #{tpu_custom_call.1} parent=5 // pred_check
        _
      $region38: #{tpu_custom_call.1} parent=5 // pred_check_branch
        %268 = sbr.rel (%p265) target = $region40
      $region39: #{tpu_custom_call.1} parent=5 // pred_region
        %s269 = ssub.s32 %s18, 1
        // Predicated region
        $region41: #{tpu_custom_call.1} parent=39 // pred_check
          %p270 = pneg %p56
        $region42: #{tpu_custom_call.1} parent=39 // pred_check_branch
          %272 = sbr.rel (%p270) target = $region44
        $region43: #{tpu_custom_call.1} parent=39 // pred_region
          %273 = dma.done [#allocation4], 128
        $region44: #{tpu_custom_call.1} parent=39 // pred_fallthru
          _
        %s274 = sand.u32 %s23, 1
        %s275 = scalar_lea.sflag [#allocation7], %s274
        %s276 = sand.u32 %s69, 1
        %s277 = smul.addr %s276, 64
        %s278 = scalar_lea.vmem [#allocation6], %s277
        // Predicated region
        $region45: #{tpu_custom_call.1} parent=39 // pred_check
          %p279 = pneg %p82
        $region46: #{tpu_custom_call.1} parent=39 // pred_check_branch
          %281 = sbr.rel (%p279) target = $region48
        $region47: #{tpu_custom_call.1} parent=39 // pred_region
          %282 = dma.done %s275, 1024
        $region48: #{tpu_custom_call.1} parent=39 // pred_fallthru
          _
        %s283 = sand.u32 %s23, 1
        %s284 = scalar_lea.sflag [#allocation7], %s283
        %s285 = sand.u32 %s121, 1
        %s286 = smul.addr %s285, 64
        %s287 = scalar_lea.vmem [#allocation8], %s286
        // Predicated region
        $region49: #{tpu_custom_call.1} parent=39 // pred_check
          %p288 = pneg %p134
        $region50: #{tpu_custom_call.1} parent=39 // pred_check_branch
          %290 = sbr.rel (%p288) target = $region52
        $region51: #{tpu_custom_call.1} parent=39 // pred_region
          %291 = dma.done %s284, 1024
        $region52: #{tpu_custom_call.1} parent=39 // pred_fallthru
          _
        %p292 = pneg %p56
        %p293 = pneg %p53
        %s294 = sand.u32 %s23, 1
        %s295 = scalar_lea.sflag [#allocation7], %s294
        %s296 = sand.u32 %s69, 1
        %s297 = smul.addr %s296, 64
        %s298 = scalar_lea.vmem [#allocation6], %s297
        %p299 = pneg %p82
        %p300 = pneg %p79
        %p301 = scmp.lt.s32.totalorder %s28, 1
        %s302 = scalar_select %p301, %s28, 1
        %s303 = scalar_lea.vmem %s2, %s302
        %p304 = pneg %p108
        %p305 = pneg %p105
        %s306 = sand.u32 %s23, 1
        %s307 = scalar_lea.sflag [#allocation7], %s306
        %s308 = sand.u32 %s121, 1
        %s309 = smul.addr %s308, 64
        %s310 = scalar_lea.vmem [#allocation8], %s309
        %p311 = pneg %p134
        %p312 = pneg %p131
        %p313 = pneg %p155
        %p314 = pneg %p152
        %p315 = pneg %p181
        %p316 = pneg %p178
        %s317 = sand.u32 %s168, 1
        %s318 = scalar_lea.sflag [#allocation5], %s317
        %s319 = sand.u32 %s168, 1
        %s320 = smul.addr %s319, 8
        %s321 = scalar_lea.vmem [#allocation9], %s320
        %p322 = scmp.lt.s32.totalorder %s28, 1
        %s323 = scalar_select %p322, %s28, 1
        %s324 = scalar_lea.vmem %s2, %s323
        %s325 = smul.u32 16, %s28
        %p327 = scmp.eq.s32.totalorder %s28, 0
        // Predicated region
        $region53: #{tpu_custom_call.1} parent=39 // pred_check
          %p328 = pneg %p327
        $region54: #{tpu_custom_call.1} parent=39 // pred_check_branch
          %330 = sbr.rel (%p328) target = $region56
        $region55: #{tpu_custom_call.1} parent=39 // pred_region
          %331 = vst [vmem:[#allocation2] sm:$0xff] 0.0
        $region56: #{tpu_custom_call.1} parent=39 // pred_fallthru
          _
        %v332 = vld [vmem:[#allocation3] sm:$0xff]
        %v333 = vpack.c.bf16 %v332, %v332
        %v334 = vld [vmem:[%s278] sm:$0xf]
        %v335 = vld [vmem:[%s278 + $0x4] sm:$0xf]
        %v336 = vld [vmem:[%s278 + $0x8] sm:$0xf]
        %v337 = vld [vmem:[%s278 + $0xc] sm:$0xf]
        %v338 = vld [vmem:[%s278 + $0x10] sm:$0xf]
        %v339 = vld [vmem:[%s278 + $0x14] sm:$0xf]
        %v340 = vld [vmem:[%s278 + $0x18] sm:$0xf]
        %v341 = vld [vmem:[%s278 + $0x1c] sm:$0xf]
        %v342 = vld [vmem:[%s278 + $0x20] sm:$0xf]
        %v343 = vld [vmem:[%s278 + $0x24] sm:$0xf]
        %v344 = vld [vmem:[%s278 + $0x28] sm:$0xf]
        %v345 = vld [vmem:[%s278 + $0x2c] sm:$0xf]
        %v346 = vld [vmem:[%s278 + $0x30] sm:$0xf]
        %v347 = vld [vmem:[%s278 + $0x34] sm:$0xf]
        %v348 = vld [vmem:[%s278 + $0x38] sm:$0xf]
        %v349 = vld [vmem:[%s278 + $0x3c] sm:$0xf]
        %v350 = vld [vmem:[%s324] sm:$0x1]
        %v352 = vlaneseq
        %v353 = vshrl.u32 %v352, 7
        %v354 = vsub.s32 0, %v353
        %v355 = vrot.slane %v350, %v354
        %v373 = vunpack.c.l.b16 %v334
        %v374 = vunpack.c.l.b16 %v335
        %v375 = vunpack.c.l.b16 %v336
        %v376 = vunpack.c.l.b16 %v337
        %v377 = vunpack.c.l.b16 %v338
        %v378 = vunpack.c.l.b16 %v339
        %v379 = vunpack.c.l.b16 %v340
        %v380 = vunpack.c.l.b16 %v341
        %v381 = vunpack.c.l.b16 %v342
        %v382 = vunpack.c.l.b16 %v343
        %v383 = vunpack.c.l.b16 %v344
        %v384 = vunpack.c.l.b16 %v345
        %v385 = vunpack.c.l.b16 %v346
        %v386 = vunpack.c.l.b16 %v347
        %v387 = vunpack.c.l.b16 %v348
        %v388 = vunpack.c.l.b16 %v349
        %v389 = vpack.c.b16 %v374, %v373
        %v390 = vpack.c.b16 %v376, %v375
        %v391 = vpack.c.b16 %v378, %v377
        %v392 = vpack.c.b16 %v380, %v379
        %v393 = vpack.c.b16 %v382, %v381
        %v394 = vpack.c.b16 %v384, %v383
        %v395 = vpack.c.b16 %v386, %v385
        %v396 = vpack.c.b16 %v388, %v387
        %405 = vmatprep.subr.bf16.mxu0 0
        %406 = vmatpush1.bf16.msra.mxu0 %v396
        %407 = vmatprep.subr.bf16.mxu0 0
        %408 = vmatpush1.bf16.msra.mxu0 %v395
        %409 = vmatprep.subr.bf16.mxu0 0
        %410 = vmatpush1.bf16.msra.mxu0 %v394
        %411 = vmatprep.subr.bf16.mxu0 0
        %412 = vmatpush1.bf16.msra.mxu0 %v393
        %413 = vmatprep.subr.bf16.mxu0 0
        %414 = vmatpush1.bf16.msra.mxu0 %v392
        %415 = vmatprep.subr.bf16.mxu0 0
        %416 = vmatpush1.bf16.msra.mxu0 %v391
        %417 = vmatprep.subr.bf16.mxu0 0
        %418 = vmatpush1.bf16.msra.mxu0 %v390
        %419 = vmatprep.subr.bf16.mxu0 0
        %420 = vmatpush1.bf16.msra.mxu0 %v389
        %421 = vmatprep.subr.bf16.mxu0 0
        %422 = vmatpush2.bf16.msra.mxu0 0
        %423 = vmatprep.subr.bf16.mxu0 0
        %424 = vmatpush2.bf16.msra.mxu0 0
        %425 = vmatprep.subr.bf16.mxu0 0
        %426 = vmatpush2.bf16.msra.mxu0 0
        %427 = vmatprep.subr.bf16.mxu0 0
        %428 = vmatpush2.bf16.msra.mxu0 0
        %429 = vmatprep.subr.bf16.mxu0 0
        %430 = vmatpush2.bf16.msra.mxu0 0
        %431 = vmatprep.subr.bf16.mxu0 0
        %432 = vmatpush2.bf16.msra.mxu0 0
        %433 = vmatprep.subr.bf16.mxu0 0
        %434 = vmatpush2.bf16.msra.mxu0 0
        %435 = vmatprep.subr.bf16.mxu0 0
        %436 = vmatpush2.bf16.msra.mxu0 0
        %437 = vmatprep.mubr.bf16.mxu0 0
        %438 = vmatmul.mubr.bf16.gmra.mxu0 %v333
        %v439 = vpop.f32.mrf.mxu0
        %v440 = vadd.f32 %v355, %v439
        %v441 = vpop.f32.mrf.mxu0
        %v442 = vpop.f32.mrf.mxu0
        %v443 = vpop.f32.mrf.mxu0
        %444 = vdwg.mxu0
        %v445 = vmul.f32 %v440, 0.5
        %v446 = vmul.f32 %v440, %v440
        %v447 = vmul.f32 %v446, %v440
        %v448 = vmul.f32 %v447, 0.044715
        %v449 = vadd.f32 %v440, %v448
        %v450 = vmul.f32 %v449, 0.7978846
        %v451 = vtanh.pop %v450
        %v452 = vadd.f32 %v451, 1.0
        %v453 = vmul.f32 %v445, %v452
        %v454 = vld [vmem:[#allocation2] sm:$0xff]
        %v455 = vpack.c.bf16 %v453, %v453
        %v456 = vld [vmem:[%s287] sm:$0xf]
        %v457 = vld [vmem:[%s287 + $0x4] sm:$0xf]
        %v458 = vld [vmem:[%s287 + $0x8] sm:$0xf]
        %v459 = vld [vmem:[%s287 + $0xc] sm:$0xf]
        %v460 = vld [vmem:[%s287 + $0x10] sm:$0xf]
        %v461 = vld [vmem:[%s287 + $0x14] sm:$0xf]
        %v462 = vld [vmem:[%s287 + $0x18] sm:$0xf]
        %v463 = vld [vmem:[%s287 + $0x1c] sm:$0xf]
        %v464 = vld [vmem:[%s287 + $0x20] sm:$0xf]
        %v465 = vld [vmem:[%s287 + $0x24] sm:$0xf]
        %v466 = vld [vmem:[%s287 + $0x28] sm:$0xf]
        %v467 = vld [vmem:[%s287 + $0x2c] sm:$0xf]
        %v468 = vld [vmem:[%s287 + $0x30] sm:$0xf]
        %v469 = vld [vmem:[%s287 + $0x34] sm:$0xf]
        %v470 = vld [vmem:[%s287 + $0x38] sm:$0xf]
        %v471 = vld [vmem:[%s287 + $0x3c] sm:$0xf]
        %v488 = vunpack.c.l.b16 %v456
        %v489 = vunpack.c.l.b16 %v457
        %v490 = vunpack.c.l.b16 %v458
        %v491 = vunpack.c.l.b16 %v459
        %v492 = vunpack.c.l.b16 %v460
        %v493 = vunpack.c.l.b16 %v461
        %v494 = vunpack.c.l.b16 %v462
        %v495 = vunpack.c.l.b16 %v463
        %v496 = vunpack.c.l.b16 %v464
        %v497 = vunpack.c.l.b16 %v465
        %v498 = vunpack.c.l.b16 %v466
        %v499 = vunpack.c.l.b16 %v467
        %v500 = vunpack.c.l.b16 %v468
        %v501 = vunpack.c.l.b16 %v469
        %v502 = vunpack.c.l.b16 %v470
        %v503 = vunpack.c.l.b16 %v471
        %v504 = vpack.c.b16 %v489, %v488
        %v505 = vpack.c.b16 %v491, %v490
        %v506 = vpack.c.b16 %v493, %v492
        %v507 = vpack.c.b16 %v495, %v494
        %v508 = vpack.c.b16 %v497, %v496
        %v509 = vpack.c.b16 %v499, %v498
        %v510 = vpack.c.b16 %v501, %v500
        %v511 = vpack.c.b16 %v503, %v502
        %520 = vmatprep.subr.bf16.mxu0 0
        %521 = vmatpush1.bf16.msra.mxu0 %v511
        %522 = vmatprep.subr.bf16.mxu0 0
        %523 = vmatpush1.bf16.msra.mxu0 %v510
        %524 = vmatprep.subr.bf16.mxu0 0
        %525 = vmatpush1.bf16.msra.mxu0 %v509
        %526 = vmatprep.subr.bf16.mxu0 0
        %527 = vmatpush1.bf16.msra.mxu0 %v508
        %528 = vmatprep.subr.bf16.mxu0 0
        %529 = vmatpush1.bf16.msra.mxu0 %v507
        %530 = vmatprep.subr.bf16.mxu0 0
        %531 = vmatpush1.bf16.msra.mxu0 %v506
        %532 = vmatprep.subr.bf16.mxu0 0
        %533 = vmatpush1.bf16.msra.mxu0 %v505
        %534 = vmatprep.subr.bf16.mxu0 0
        %535 = vmatpush1.bf16.msra.mxu0 %v504
        %536 = vmatprep.subr.bf16.mxu0 0
        %537 = vmatpush2.bf16.msra.mxu0 0
        %538 = vmatprep.subr.bf16.mxu0 0
        %539 = vmatpush2.bf16.msra.mxu0 0
        %540 = vmatprep.subr.bf16.mxu0 0
        %541 = vmatpush2.bf16.msra.mxu0 0
        %542 = vmatprep.subr.bf16.mxu0 0
        %543 = vmatpush2.bf16.msra.mxu0 0
        %544 = vmatprep.subr.bf16.mxu0 0
        %545 = vmatpush2.bf16.msra.mxu0 0
        %546 = vmatprep.subr.bf16.mxu0 0
        %547 = vmatpush2.bf16.msra.mxu0 0
        %548 = vmatprep.subr.bf16.mxu0 0
        %549 = vmatpush2.bf16.msra.mxu0 0
        %550 = vmatprep.subr.bf16.mxu0 0
        %551 = vmatpush2.bf16.msra.mxu0 0
        %552 = vmatprep.mubr.bf16.mxu0 0
        %553 = vmatmul.mubr.bf16.gmra.mxu0 %v455
        %v554 = vpop.f32.mrf.mxu0
        %v555 = vadd.f32 0.0, %v554
        %v556 = vpop.f32.mrf.mxu0
        %v557 = vpop.f32.mrf.mxu0
        %v558 = vpop.f32.mrf.mxu0
        %559 = vdwg.mxu0
        %v560 = vadd.f32 %v454, %v555
        %561 = vst [vmem:[#allocation2] sm:$0xff] %v560
        %p562 = scmp.eq.s32.totalorder %s28, 1
        // Predicated region
        $region57: #{tpu_custom_call.1} parent=39 // pred_check
          %p563 = pneg %p562
        $region58: #{tpu_custom_call.1} parent=39 // pred_check_branch
          %565 = sbr.rel (%p563) target = $region60
        $region59: #{tpu_custom_call.1} parent=39 // pred_region
          %v566 = vld [vmem:[#allocation2] sm:$0xff]
          %v567 = vld [vmem:[%s4] sm:$0x1]
          %v569 = vlaneseq
          %v570 = vshrl.u32 %v569, 7
          %v571 = vsub.s32 0, %v570
          %v572 = vrot.slane %v567, %v571
          %v574 = vadd.f32 %v566, %v572
          %575 = vst [vmem:[%s321] sm:$0xff] %v574
        $region60: #{tpu_custom_call.1} parent=39 // pred_fallthru
          _
        %s576 = sand.u32 %s168, 1
        %s577 = scalar_lea.sflag [#allocation5], %s576
        %s578 = sand.u32 %s168, 1
        %s579 = smul.addr %s578, 8
        %s580 = scalar_lea.vmem [#allocation9], %s579
        // Predicated region
        $region61: #{tpu_custom_call.1} parent=39 // pred_check
          %p581 = pneg %p178
        $region62: #{tpu_custom_call.1} parent=39 // pred_check_branch
          %583 = sbr.rel (%p581) target = $region64
        $region63: #{tpu_custom_call.1} parent=39 // pred_region
          %s585 = ssub.s32 128, 128
          %586 = vsyncadd %s577, %s585
          %s587 = smul.addr %s27, 128
          %s588 = scalar_lea.hbm %s5, %s587
          %s590 = sshll.u32 %s580, 4
          %s591 = int_to_ptr.vmem [resolvable:$true] %s590
          %593 = dma.vmem_to_hbm [thread:$0]  %s591, 128, %s588, %s577
        $region64: #{tpu_custom_call.1} parent=39 // pred_fallthru
          _
      $region40: #{tpu_custom_call.1} parent=5 // pred_fallthru
        _
      %p594 = scmp.le.s32.totalorder 2, %s18
      // Predicated region
      $region65: #{tpu_custom_call.1} parent=5 // pred_check
        %p595 = pneg %p594
      $region66: #{tpu_custom_call.1} parent=5 // pred_check_branch
        %597 = sbr.rel (%p595) target = $region68
      $region67: #{tpu_custom_call.1} parent=5 // pred_region
        %s598 = ssub.s32 %s18, 2
        // Predicated region
        $region69: #{tpu_custom_call.1} parent=67 // pred_check
          %p599 = pneg %p184
        $region70: #{tpu_custom_call.1} parent=67 // pred_check_branch
          %601 = sbr.rel (%p599) target = $region72
        $region71: #{tpu_custom_call.1} parent=67 // pred_region
          %s602 = sand.u32 %s169, 1
          %s603 = scalar_lea.sflag [#allocation5], %s602
          %s604 = sand.u32 %s169, 1
          %s605 = smul.addr %s604, 8
          %s606 = scalar_lea.vmem [#allocation9], %s605
          %607 = dma.done %s603, 128
        $region72: #{tpu_custom_call.1} parent=67 // pred_fallthru
          _
      $region68: #{tpu_custom_call.1} parent=5 // pred_fallthru
        _
    $region6: #{tpu_custom_call.1} parent=1 // loop_footer
      %s22 = sadd.s32 1, %s18
    $region7: #{tpu_custom_call.1} parent=1 // loop_footer_branch
      %17 = sbr.rel target = $region3
    $region8: #{tpu_custom_call.1} parent=1 // loop_exit
      _
    %608 = vsyncpa [#allocation4], 1
    %s609 = scalar_lea.sflag [#allocation4], 1
    %610 = vsyncpa %s609, 1
    %611 = vsyncpa [#allocation7], 1
    %s612 = scalar_lea.sflag [#allocation7], 1
    %613 = vsyncpa %s612, 1
    %614 = vsyncpa [#allocation5], 1
    %s615 = scalar_lea.sflag [#allocation5], 1
    %616 = vsyncpa %s615, 1

// kernel: tpu_custom_call.1
$region0: #{tpu_custom_call.1}
  #allocation0 [shape = 'u32[]', space=smem, size = 0x4, offset = 0x4, fixed_abs, tag = 'smem constant byte address 0x4 - core index']
  #allocation1 [shape = 'u32[144,128]{1,0:T(1,128)}', space=vmem, size = 0x12000, scoped, tag = 'internal scratch']
  #allocation2 [shape = 'f32[8,128]{1,0:T(8,128)}', space=vmem, size = 0x1000, scoped, tag = 'scratch operand']
  %s0 = inlined_call_operand.hbm [shape: f32[16,128], index: 0, kind: input, shape index: {}]
  %s1 = inlined_call_operand.hbm [shape: bf16[128,256], index: 1, kind: input, shape index: {}]
  %s2 = inlined_call_operand.vmem [shape: f32[1,256], index: 2, kind: input, shape index: {}]
  %s3 = inlined_call_operand.hbm [shape: bf16[256,128], index: 3, kind: input, shape index: {}]
  %s4 = inlined_call_operand.vmem [shape: f32[1,128], index: 4, kind: input, shape index: {}]
  %s5 = inlined_call_operand.hbm [shape: f32[16,128], index: 5, kind: output, shape index: {}]
  %s6 = sld [smem:[#allocation0]]
  $region73: #{tpu_custom_call.1} parent=0
    _
  %s8 = ssub.s32 1, %s6
  %s9 = scalar_select 0, %s8, %s6
  $region1: #{tpu_custom_call.1} parent=0
    #allocation3 [shape = 'u8[8192]{0}', space=vmem, size = 0x2000, scoped, tag = 'input window, operand 0']
    #allocation4 [shape = 's32[2]{0}', space=sflag, size = 0x8, scoped, tag = 'scoped memory for tpu_custom_call.1']
    #allocation5 [shape = 's32[2]{0}', space=sflag, size = 0x8, scoped, tag = 'scoped memory for tpu_custom_call.1']
    #allocation6 [shape = 'u8[65536]{0}', space=vmem, size = 0x10000, scoped, tag = 'input window, operand 1']
    #allocation7 [shape = 's32[2]{0}', space=sflag, size = 0x8, scoped, tag = 'scoped memory for tpu_custom_call.1']
    #allocation8 [shape = 'u8[65536]{0}', space=vmem, size = 0x10000, scoped, tag = 'input window, operand 3']
    #allocation9 [shape = 'u8[8192]{0}', space=vmem, size = 0x2000, scoped, tag = 'output window, operand 0']
    %10 = vsyncpa [#allocation4], 0
    %s11 = scalar_lea.sflag [#allocation4], 1
    %12 = vsyncpa %s11, 0
    %13 = vsyncpa [#allocation7], 0
    %s14 = scalar_lea.sflag [#allocation7], 1
    %15 = vsyncpa %s14, 0
    %16 = vsyncpa [#allocation5], 0
    %s17 = scalar_lea.sflag [#allocation5], 1
    %18 = vsyncpa %s17, 0
    loop: start=0, step=1, limit=6
    $region2: #{tpu_custom_call.1} parent=1 // loop_pre_header
      _
    $region3: #{tpu_custom_call.1} parent=1 // loop_header
      %s20 = sphi 0, %s24
      %p21 = scmp.ge.s32.totalorder %s20, 6
      %s27 = sphi 0, %s39
      %s28 = sphi 0, %s35
      %s29 = sphi 0, %s27
      %s30 = sphi 0, %s28
      %s31 = sphi 0, %s29
      %s32 = sphi 0, %s30
      %s42 = sphi 0, %s44
      %s45 = sphi 0, %s42
      %s46 = sphi 0, %s45
      %s62 = sphi 0, %s46
      %s68 = sphi 0, %s70
      %s71 = sphi 0, %s68
      %s72 = sphi 0, %s71
      %s88 = sphi 0, %s72
      %s94 = sphi 0, %s96
      %s97 = sphi 0, %s94
      %s98 = sphi 0, %s97
      %s114 = sphi 0, %s98
      %s120 = sphi 0, %s122
      %s123 = sphi 0, %s120
      %s124 = sphi 0, %s123
      %s140 = sphi 0, %s124
      %s144 = sphi 0, %s144
      %s146 = sphi 0, %s144
      %s147 = sphi 0, %s146
      %s161 = sphi 0, %s147
      %s167 = sphi 0, %s169
      %s170 = sphi 0, %s167
      %s171 = sphi 0, %s170
      %s187 = sphi 0, %s171
    $region4: #{tpu_custom_call.1} parent=1 // loop_header_branch
      %23 = sbr.rel (%p21) target = $region8
    $region5: #{tpu_custom_call.1} parent=1 // loop_body
      %s25 = ssub.s32 %s20, 1
      %s26 = ssub.s32 %s20, 2
      %s33 = sadd.s32 1, %s28
      %p34 = scmp.ge.s32.totalorder %s33, 2
      %s35 = scalar_select %p34, 0, %s33
      %s36 = sadd.s32 1, %s27
      %s37 = scalar_select %p34, %s36, %s27
      %p38 = scmp.ge.s32.totalorder %s37, 2
      %s39 = scalar_select %p38, 0, %s37
      %s40 = ssub.s32 %s27, %s39
      %p41 = scmp.eq.s32.totalorder %s40, 0
      %s43 = sadd.s32 %s42, 1
      %s44 = scalar_select %p41, %s42, %s43
      %p47 = pneg %p41
      %p48 = scmp.eq.s32.totalorder %s20, 3
      %p49 = por %p47, %p48
      %p50 = scmp.ne.s32.totalorder %s42, %s45
      %p51 = scmp.eq.s32.totalorder %s20, 0
      %p52 = por %p50, %p51
      %p53 = scmp.ne.s32.totalorder %s42, %s45
      %p54 = scmp.eq.s32.totalorder %s25, 3
      %p55 = por %p53, %p54
      %p56 = scmp.ne.s32.totalorder %s45, %s46
      %p57 = scmp.eq.s32.totalorder %s25, 0
      %p58 = por %p56, %p57
      %p59 = scmp.ne.s32.totalorder %s45, %s46
      %p60 = scmp.eq.s32.totalorder %s26, 3
      %p61 = por %p59, %p60
      %p63 = scmp.ne.s32.totalorder %s46, %s62
      %p64 = scmp.eq.s32.totalorder %s26, 0
      %p65 = por %p63, %p64
      %s66 = ssub.s32 %s28, %s35
      %p67 = scmp.eq.s32.totalorder %s66, 0
      %s69 = sadd.s32 %s68, 1
      %s70 = scalar_select %p67, %s68, %s69
      %p73 = pneg %p67
      %p74 = scmp.eq.s32.totalorder %s20, 3
      %p75 = por %p73, %p74
      %p76 = scmp.ne.s32.totalorder %s68, %s71
      %p77 = scmp.eq.s32.totalorder %s20, 0
      %p78 = por %p76, %p77
      %p79 = scmp.ne.s32.totalorder %s68, %s71
      %p80 = scmp.eq.s32.totalorder %s25, 3
      %p81 = por %p79, %p80
      %p82 = scmp.ne.s32.totalorder %s71, %s72
      %p83 = scmp.eq.s32.totalorder %s25, 0
      %p84 = por %p82, %p83
      %p85 = scmp.ne.s32.totalorder %s71, %s72
      %p86 = scmp.eq.s32.totalorder %s26, 3
      %p87 = por %p85, %p86
      %p89 = scmp.ne.s32.totalorder %s72, %s88
      %p90 = scmp.eq.s32.totalorder %s26, 0
      %p91 = por %p89, %p90
      %s92 = ssub.s32 %s28, %s35
      %p93 = scmp.eq.s32.totalorder %s92, 0
      %s95 = sadd.s32 %s94, 1
      %s96 = scalar_select %p93, %s94, %s95
      %p99 = pneg %p93
      %p100 = scmp.eq.s32.totalorder %s20, 3
      %p101 = por %p99, %p100
      %p102 = scmp.ne.s32.totalorder %s94, %s97
      %p103 = scmp.eq.s32.totalorder %s20, 0
      %p104 = por %p102, %p103
      %p105 = scmp.ne.s32.totalorder %s94, %s97
      %p106 = scmp.eq.s32.totalorder %s25, 3
      %p107 = por %p105, %p106
      %p108 = scmp.ne.s32.totalorder %s97, %s98
      %p109 = scmp.eq.s32.totalorder %s25, 0
      %p110 = por %p108, %p109
      %p111 = scmp.ne.s32.totalorder %s97, %s98
      %p112 = scmp.eq.s32.totalorder %s26, 3
      %p113 = por %p111, %p112
      %p115 = scmp.ne.s32.totalorder %s98, %s114
      %p116 = scmp.eq.s32.totalorder %s26, 0
      %p117 = por %p115, %p116
      %s118 = ssub.s32 %s28, %s35
      %p119 = scmp.eq.s32.totalorder %s118, 0
      %s121 = sadd.s32 %s120, 1
      %s122 = scalar_select %p119, %s120, %s121
      %p125 = pneg %p119
      %p126 = scmp.eq.s32.totalorder %s20, 3
      %p127 = por %p125, %p126
      %p128 = scmp.ne.s32.totalorder %s120, %s123
      %p129 = scmp.eq.s32.totalorder %s20, 0
      %p130 = por %p128, %p129
      %p131 = scmp.ne.s32.totalorder %s120, %s123
      %p132 = scmp.eq.s32.totalorder %s25, 3
      %p133 = por %p131, %p132
      %p134 = scmp.ne.s32.totalorder %s123, %s124
      %p135 = scmp.eq.s32.totalorder %s25, 0
      %p136 = por %p134, %p135
      %p137 = scmp.ne.s32.totalorder %s123, %s124
      %p138 = scmp.eq.s32.totalorder %s26, 3
      %p139 = por %p137, %p138
      %p141 = scmp.ne.s32.totalorder %s124, %s140
      %p142 = scmp.eq.s32.totalorder %s26, 0
      %p143 = por %p141, %p142
      %s145 = sadd.s32 %s144, 1
      %p148 = scmp.eq.s32.totalorder %s20, 3
      %p149 = scmp.ne.s32.totalorder %s144, %s146
      %p150 = scmp.eq.s32.totalorder %s20, 0
      %p151 = por %p149, %p150
      %p152 = scmp.ne.s32.totalorder %s144, %s146
      %p153 = scmp.eq.s32.totalorder %s25, 3
      %p154 = por %p152, %p153
      %p155 = scmp.ne.s32.totalorder %s146, %s147
      %p156 = scmp.eq.s32.totalorder %s25, 0
      %p157 = por %p155, %p156
      %p158 = scmp.ne.s32.totalorder %s146, %s147
      %p159 = scmp.eq.s32.totalorder %s26, 3
      %p160 = por %p158, %p159
      %p162 = scmp.ne.s32.totalorder %s147, %s161
      %p163 = scmp.eq.s32.totalorder %s26, 0
      %p164 = por %p162, %p163
      %s165 = ssub.s32 %s27, %s39
      %p166 = scmp.eq.s32.totalorder %s165, 0
      %s168 = sadd.s32 %s167, 1
      %s169 = scalar_select %p166, %s167, %s168
      %p172 = pneg %p166
      %p173 = scmp.eq.s32.totalorder %s20, 3
      %p174 = por %p172, %p173
      %p175 = scmp.ne.s32.totalorder %s167, %s170
      %p176 = scmp.eq.s32.totalorder %s20, 0
      %p177 = por %p175, %p176
      %p178 = scmp.ne.s32.totalorder %s167, %s170
      %p179 = scmp.eq.s32.totalorder %s25, 3
      %p180 = por %p178, %p179
      %p181 = scmp.ne.s32.totalorder %s170, %s171
      %p182 = scmp.eq.s32.totalorder %s25, 0
      %p183 = por %p181, %p182
      %p184 = scmp.ne.s32.totalorder %s170, %s171
      %p185 = scmp.eq.s32.totalorder %s26, 3
      %p186 = por %p184, %p185
      %p188 = scmp.ne.s32.totalorder %s171, %s187
      %p189 = scmp.eq.s32.totalorder %s26, 0
      %p190 = por %p188, %p189
      %p191 = scmp.le.s32.totalorder 1, %s20
      %p192 = scmp.lt.s32.totalorder %s20, 5
      %p193 = pnand %p191, %p192
      %p194 = pneg %p193
      // Predicated region
      $region9: #{tpu_custom_call.1} parent=5 // pred_check
        _
      $region10: #{tpu_custom_call.1} parent=5 // pred_check_branch
        %196 = sbr.rel (%p193) target = $region12
      $region11: #{tpu_custom_call.1} parent=5 // pred_region
        %s197 = ssub.s32 %s20, 1
        // Predicated region
        $region13: #{tpu_custom_call.1} parent=11 // pred_check
          %p198 = pneg %p157
        $region14: #{tpu_custom_call.1} parent=11 // pred_check_branch
          %200 = sbr.rel (%p198) target = $region16
        $region15: #{tpu_custom_call.1} parent=11 // pred_region
          _
        $region16: #{tpu_custom_call.1} parent=11 // pred_fallthru
          _
      $region12: #{tpu_custom_call.1} parent=5 // pred_fallthru
        _
      %p201 = scmp.lt.s32.totalorder %s20, 4
      // Predicated region
      $region17: #{tpu_custom_call.1} parent=5 // pred_check
        %p202 = pneg %p201
      $region18: #{tpu_custom_call.1} parent=5 // pred_check_branch
        %204 = sbr.rel (%p202) target = $region20
      $region19: #{tpu_custom_call.1} parent=5 // pred_region
        // Predicated region
        $region21: #{tpu_custom_call.1} parent=19 // pred_check
          %p205 = pneg %p52
        $region22: #{tpu_custom_call.1} parent=19 // pred_check_branch
          %207 = sbr.rel (%p205) target = $region24
        $region23: #{tpu_custom_call.1} parent=19 // pred_region
          %s208 = sand.u32 %s42, 1
          %s209 = scalar_lea.sflag [#allocation4], %s208
          %s210 = sand.u32 %s42, 1
          %s211 = smul.addr %s210, 8
          %s212 = scalar_lea.vmem [#allocation3], %s211
          %s214 = ssub.s32 128, 128
          %215 = vsyncadd %s209, %s214
          %s216 = smul.addr %s27, 128
          %s217 = scalar_lea.hbm %s0, %s216
          %s219 = sshll.u32 %s212, 4
          %s220 = int_to_ptr.vmem [resolvable:$true] %s219
          %222 = dma.hbm_to_vmem [thread:$0]  %s217, 128, %s220, %s209
        $region24: #{tpu_custom_call.1} parent=19 // pred_fallthru
          _
        // Predicated region
        $region25: #{tpu_custom_call.1} parent=19 // pred_check
          %p223 = pneg %p78
        $region26: #{tpu_custom_call.1} parent=19 // pred_check_branch
          %225 = sbr.rel (%p223) target = $region28
        $region27: #{tpu_custom_call.1} parent=19 // pred_region
          %s226 = sand.u32 %s20, 1
          %s227 = scalar_lea.sflag [#allocation7], %s226
          %s228 = sand.u32 %s68, 1
          %s229 = smul.addr %s228, 64
          %s230 = scalar_lea.vmem [#allocation6], %s229
          %s232 = ssub.s32 1024, 1024
          %233 = vsyncadd %s227, %s232
          %s234 = smul.addr %s28, 64
          %s235 = scalar_lea.hbm %s1, %s234
          %s236 = sshll.u32 %s230, 4
          %s237 = int_to_ptr.vmem [resolvable:$true] %s236
          %242 = dma.hbm_to_vmem [thread:$0]  %s235, 1024, %s237, %s227, 128, 64, 4
        $region28: #{tpu_custom_call.1} parent=19 // pred_fallthru
          _
        // Predicated region
        $region29: #{tpu_custom_call.1} parent=19 // pred_check
          %p243 = pneg %p104
        $region30: #{tpu_custom_call.1} parent=19 // pred_check_branch
          %245 = sbr.rel (%p243) target = $region32
        $region31: #{tpu_custom_call.1} parent=19 // pred_region
          %p246 = scmp.lt.s32.totalorder %s28, 1
          %s247 = scalar_select %p246, %s28, 1
          %s248 = scalar_lea.vmem %s2, %s247
        $region32: #{tpu_custom_call.1} parent=19 // pred_fallthru
          _
        // Predicated region
        $region33: #{tpu_custom_call.1} parent=19 // pred_check
          %p249 = pneg %p130
        $region34: #{tpu_custom_call.1} parent=19 // pred_check_branch
          %251 = sbr.rel (%p249) target = $region36
        $region35: #{tpu_custom_call.1} parent=19 // pred_region
          %s252 = sand.u32 %s20, 1
          %s253 = scalar_lea.sflag [#allocation7], %s252
          %s254 = sand.u32 %s120, 1
          %s255 = smul.addr %s254, 64
          %s256 = scalar_lea.vmem [#allocation8], %s255
          %s257 = smul.u32 16, %s28
          %s259 = ssub.s32 1024, 1024
          %260 = vsyncadd %s253, %s259
          %s261 = smul.addr %s257, 64
          %s262 = scalar_lea.hbm %s3, %s261
          %s263 = sshll.u32 %s256, 4
          %s264 = int_to_ptr.vmem [resolvable:$true] %s263
          %269 = dma.hbm_to_vmem [thread:$0]  %s262, 1024, %s264, %s253, 64, 64, 4
        $region36: #{tpu_custom_call.1} parent=19 // pred_fallthru
          _
      $region20: #{tpu_custom_call.1} parent=5 // pred_fallthru
        _
      %p270 = scmp.le.s32.totalorder 1, %s20
      %p271 = scmp.lt.s32.totalorder %s20, 5
      %p272 = pnand %p270, %p271
      %p273 = pneg %p272
      // Predicated region
      $region37: #{tpu_custom_call.1} parent=5 // pred_check
        _
      $region38: #{tpu_custom_call.1} parent=5 // pred_check_branch
        %275 = sbr.rel (%p272) target = $region40
      $region39: #{tpu_custom_call.1} parent=5 // pred_region
        %s276 = ssub.s32 %s20, 1
        %s277 = sand.u32 %s45, 1
        %s278 = scalar_lea.sflag [#allocation4], %s277
        %s279 = sand.u32 %s45, 1
        %s280 = smul.addr %s279, 8
        %s281 = scalar_lea.vmem [#allocation3], %s280
        // Predicated region
        $region41: #{tpu_custom_call.1} parent=39 // pred_check
          %p282 = pneg %p58
        $region42: #{tpu_custom_call.1} parent=39 // pred_check_branch
          %284 = sbr.rel (%p282) target = $region44
        $region43: #{tpu_custom_call.1} parent=39 // pred_region
          %285 = dma.done %s278, 128
        $region44: #{tpu_custom_call.1} parent=39 // pred_fallthru
          _
        %s286 = sand.u32 %s25, 1
        %s287 = scalar_lea.sflag [#allocation7], %s286
        %s288 = sand.u32 %s71, 1
        %s289 = smul.addr %s288, 64
        %s290 = scalar_lea.vmem [#allocation6], %s289
        // Predicated region
        $region45: #{tpu_custom_call.1} parent=39 // pred_check
          %p291 = pneg %p84
        $region46: #{tpu_custom_call.1} parent=39 // pred_check_branch
          %293 = sbr.rel (%p291) target = $region48
        $region47: #{tpu_custom_call.1} parent=39 // pred_region
          %294 = dma.done %s287, 1024
        $region48: #{tpu_custom_call.1} parent=39 // pred_fallthru
          _
        %s295 = sand.u32 %s25, 1
        %s296 = scalar_lea.sflag [#allocation7], %s295
        %s297 = sand.u32 %s123, 1
        %s298 = smul.addr %s297, 64
        %s299 = scalar_lea.vmem [#allocation8], %s298
        // Predicated region
        $region49: #{tpu_custom_call.1} parent=39 // pred_check
          %p300 = pneg %p136
        $region50: #{tpu_custom_call.1} parent=39 // pred_check_branch
          %302 = sbr.rel (%p300) target = $region52
        $region51: #{tpu_custom_call.1} parent=39 // pred_region
          %303 = dma.done %s296, 1024
        $region52: #{tpu_custom_call.1} parent=39 // pred_fallthru
          _
        %s304 = sand.u32 %s45, 1
        %s305 = scalar_lea.sflag [#allocation4], %s304
        %s306 = sand.u32 %s45, 1
        %s307 = smul.addr %s306, 8
        %s308 = scalar_lea.vmem [#allocation3], %s307
        %p309 = pneg %p58
        %p310 = pneg %p55
        %s311 = sand.u32 %s25, 1
        %s312 = scalar_lea.sflag [#allocation7], %s311
        %s313 = sand.u32 %s71, 1
        %s314 = smul.addr %s313, 64
        %s315 = scalar_lea.vmem [#allocation6], %s314
        %p316 = pneg %p84
        %p317 = pneg %p81
        %p318 = scmp.lt.s32.totalorder %s30, 1
        %s319 = scalar_select %p318, %s30, 1
        %s320 = scalar_lea.vmem %s2, %s319
        %p321 = pneg %p110
        %p322 = pneg %p107
        %s323 = sand.u32 %s25, 1
        %s324 = scalar_lea.sflag [#allocation7], %s323
        %s325 = sand.u32 %s123, 1
        %s326 = smul.addr %s325, 64
        %s327 = scalar_lea.vmem [#allocation8], %s326
        %p328 = pneg %p136
        %p329 = pneg %p133
        %p330 = pneg %p157
        %p331 = pneg %p154
        %p332 = pneg %p183
        %p333 = pneg %p180
        %s334 = sand.u32 %s170, 1
        %s335 = scalar_lea.sflag [#allocation5], %s334
        %s336 = sand.u32 %s170, 1
        %s337 = smul.addr %s336, 8
        %s338 = scalar_lea.vmem [#allocation9], %s337
        %p339 = scmp.lt.s32.totalorder %s30, 1
        %s340 = scalar_select %p339, %s30, 1
        %s341 = scalar_lea.vmem %s2, %s340
        %s342 = smul.u32 16, %s30
        %p344 = scmp.eq.s32.totalorder %s30, 0
        // Predicated region
        $region53: #{tpu_custom_call.1} parent=39 // pred_check
          %p345 = pneg %p344
        $region54: #{tpu_custom_call.1} parent=39 // pred_check_branch
          %347 = sbr.rel (%p345) target = $region56
        $region55: #{tpu_custom_call.1} parent=39 // pred_region
          %348 = vst [vmem:[#allocation2] sm:$0xff] 0.0
        $region56: #{tpu_custom_call.1} parent=39 // pred_fallthru
          _
        %v349 = vld [vmem:[%s281] sm:$0xff]
        %v350 = vpack.c.bf16 %v349, %v349
        %v351 = vld [vmem:[%s290] sm:$0xf]
        %v352 = vld [vmem:[%s290 + $0x4] sm:$0xf]
        %v353 = vld [vmem:[%s290 + $0x8] sm:$0xf]
        %v354 = vld [vmem:[%s290 + $0xc] sm:$0xf]
        %v355 = vld [vmem:[%s290 + $0x10] sm:$0xf]
        %v356 = vld [vmem:[%s290 + $0x14] sm:$0xf]
        %v357 = vld [vmem:[%s290 + $0x18] sm:$0xf]
        %v358 = vld [vmem:[%s290 + $0x1c] sm:$0xf]
        %v359 = vld [vmem:[%s290 + $0x20] sm:$0xf]
        %v360 = vld [vmem:[%s290 + $0x24] sm:$0xf]
        %v361 = vld [vmem:[%s290 + $0x28] sm:$0xf]
        %v362 = vld [vmem:[%s290 + $0x2c] sm:$0xf]
        %v363 = vld [vmem:[%s290 + $0x30] sm:$0xf]
        %v364 = vld [vmem:[%s290 + $0x34] sm:$0xf]
        %v365 = vld [vmem:[%s290 + $0x38] sm:$0xf]
        %v366 = vld [vmem:[%s290 + $0x3c] sm:$0xf]
        %v367 = vld [vmem:[%s341] sm:$0x1]
        %v369 = vlaneseq
        %v370 = vshrl.u32 %v369, 7
        %v371 = vsub.s32 0, %v370
        %v372 = vrot.slane %v367, %v371
        %v390 = vunpack.c.l.b16 %v351
        %v391 = vunpack.c.l.b16 %v352
        %v392 = vunpack.c.l.b16 %v353
        %v393 = vunpack.c.l.b16 %v354
        %v394 = vunpack.c.l.b16 %v355
        %v395 = vunpack.c.l.b16 %v356
        %v396 = vunpack.c.l.b16 %v357
        %v397 = vunpack.c.l.b16 %v358
        %v398 = vunpack.c.l.b16 %v359
        %v399 = vunpack.c.l.b16 %v360
        %v400 = vunpack.c.l.b16 %v361
        %v401 = vunpack.c.l.b16 %v362
        %v402 = vunpack.c.l.b16 %v363
        %v403 = vunpack.c.l.b16 %v364
        %v404 = vunpack.c.l.b16 %v365
        %v405 = vunpack.c.l.b16 %v366
        %v406 = vpack.c.b16 %v391, %v390
        %v407 = vpack.c.b16 %v393, %v392
        %v408 = vpack.c.b16 %v395, %v394
        %v409 = vpack.c.b16 %v397, %v396
        %v410 = vpack.c.b16 %v399, %v398
        %v411 = vpack.c.b16 %v401, %v400
        %v412 = vpack.c.b16 %v403, %v402
        %v413 = vpack.c.b16 %v405, %v404
        %422 = vmatprep.subr.bf16.mxu0 0
        %423 = vmatpush1.bf16.msra.mxu0 %v413
        %424 = vmatprep.subr.bf16.mxu0 0
        %425 = vmatpush1.bf16.msra.mxu0 %v412
        %426 = vmatprep.subr.bf16.mxu0 0
        %427 = vmatpush1.bf16.msra.mxu0 %v411
        %428 = vmatprep.subr.bf16.mxu0 0
        %429 = vmatpush1.bf16.msra.mxu0 %v410
        %430 = vmatprep.subr.bf16.mxu0 0
        %431 = vmatpush1.bf16.msra.mxu0 %v409
        %432 = vmatprep.subr.bf16.mxu0 0
        %433 = vmatpush1.bf16.msra.mxu0 %v408
        %434 = vmatprep.subr.bf16.mxu0 0
        %435 = vmatpush1.bf16.msra.mxu0 %v407
        %436 = vmatprep.subr.bf16.mxu0 0
        %437 = vmatpush1.bf16.msra.mxu0 %v406
        %438 = vmatprep.subr.bf16.mxu0 0
        %439 = vmatpush2.bf16.msra.mxu0 0
        %440 = vmatprep.subr.bf16.mxu0 0
        %441 = vmatpush2.bf16.msra.mxu0 0
        %442 = vmatprep.subr.bf16.mxu0 0
        %443 = vmatpush2.bf16.msra.mxu0 0
        %444 = vmatprep.subr.bf16.mxu0 0
        %445 = vmatpush2.bf16.msra.mxu0 0
        %446 = vmatprep.subr.bf16.mxu0 0
        %447 = vmatpush2.bf16.msra.mxu0 0
        %448 = vmatprep.subr.bf16.mxu0 0
        %449 = vmatpush2.bf16.msra.mxu0 0
        %450 = vmatprep.subr.bf16.mxu0 0
        %451 = vmatpush2.bf16.msra.mxu0 0
        %452 = vmatprep.subr.bf16.mxu0 0
        %453 = vmatpush2.bf16.msra.mxu0 0
        %454 = vmatprep.mubr.bf16.mxu0 0
        %455 = vmatmul.mubr.bf16.gmra.mxu0 %v350
        %v456 = vpop.f32.mrf.mxu0
        %v457 = vadd.f32 %v372, %v456
        %v458 = vpop.f32.mrf.mxu0
        %v459 = vpop.f32.mrf.mxu0
        %v460 = vpop.f32.mrf.mxu0
        %461 = vdwg.mxu0
        %v462 = vmul.f32 %v457, 0.5
        %v463 = vmul.f32 %v457, %v457
        %v464 = vmul.f32 %v463, %v457
        %v465 = vmul.f32 %v464, 0.044715
        %v466 = vadd.f32 %v457, %v465
        %v467 = vmul.f32 %v466, 0.7978846
        %v468 = vtanh.pop %v467
        %v469 = vadd.f32 %v468, 1.0
        %v470 = vmul.f32 %v462, %v469
        %v471 = vld [vmem:[#allocation2] sm:$0xff]
        %v472 = vpack.c.bf16 %v470, %v470
        %v473 = vld [vmem:[%s299] sm:$0xf]
        %v474 = vld [vmem:[%s299 + $0x4] sm:$0xf]
        %v475 = vld [vmem:[%s299 + $0x8] sm:$0xf]
        %v476 = vld [vmem:[%s299 + $0xc] sm:$0xf]
        %v477 = vld [vmem:[%s299 + $0x10] sm:$0xf]
        %v478 = vld [vmem:[%s299 + $0x14] sm:$0xf]
        %v479 = vld [vmem:[%s299 + $0x18] sm:$0xf]
        %v480 = vld [vmem:[%s299 + $0x1c] sm:$0xf]
        %v481 = vld [vmem:[%s299 + $0x20] sm:$0xf]
        %v482 = vld [vmem:[%s299 + $0x24] sm:$0xf]
        %v483 = vld [vmem:[%s299 + $0x28] sm:$0xf]
        %v484 = vld [vmem:[%s299 + $0x2c] sm:$0xf]
        %v485 = vld [vmem:[%s299 + $0x30] sm:$0xf]
        %v486 = vld [vmem:[%s299 + $0x34] sm:$0xf]
        %v487 = vld [vmem:[%s299 + $0x38] sm:$0xf]
        %v488 = vld [vmem:[%s299 + $0x3c] sm:$0xf]
        %v505 = vunpack.c.l.b16 %v473
        %v506 = vunpack.c.l.b16 %v474
        %v507 = vunpack.c.l.b16 %v475
        %v508 = vunpack.c.l.b16 %v476
        %v509 = vunpack.c.l.b16 %v477
        %v510 = vunpack.c.l.b16 %v478
        %v511 = vunpack.c.l.b16 %v479
        %v512 = vunpack.c.l.b16 %v480
        %v513 = vunpack.c.l.b16 %v481
        %v514 = vunpack.c.l.b16 %v482
        %v515 = vunpack.c.l.b16 %v483
        %v516 = vunpack.c.l.b16 %v484
        %v517 = vunpack.c.l.b16 %v485
        %v518 = vunpack.c.l.b16 %v486
        %v519 = vunpack.c.l.b16 %v487
        %v520 = vunpack.c.l.b16 %v488
        %v521 = vpack.c.b16 %v506, %v505
        %v522 = vpack.c.b16 %v508, %v507
        %v523 = vpack.c.b16 %v510, %v509
        %v524 = vpack.c.b16 %v512, %v511
        %v525 = vpack.c.b16 %v514, %v513
        %v526 = vpack.c.b16 %v516, %v515
        %v527 = vpack.c.b16 %v518, %v517
        %v528 = vpack.c.b16 %v520, %v519
        %537 = vmatprep.subr.bf16.mxu0 0
        %538 = vmatpush1.bf16.msra.mxu0 %v528
        %539 = vmatprep.subr.bf16.mxu0 0
        %540 = vmatpush1.bf16.msra.mxu0 %v527
        %541 = vmatprep.subr.bf16.mxu0 0
        %542 = vmatpush1.bf16.msra.mxu0 %v526
        %543 = vmatprep.subr.bf16.mxu0 0
        %544 = vmatpush1.bf16.msra.mxu0 %v525
        %545 = vmatprep.subr.bf16.mxu0 0
        %546 = vmatpush1.bf16.msra.mxu0 %v524
        %547 = vmatprep.subr.bf16.mxu0 0
        %548 = vmatpush1.bf16.msra.mxu0 %v523
        %549 = vmatprep.subr.bf16.mxu0 0
        %550 = vmatpush1.bf16.msra.mxu0 %v522
        %551 = vmatprep.subr.bf16.mxu0 0
        %552 = vmatpush1.bf16.msra.mxu0 %v521
        %553 = vmatprep.subr.bf16.mxu0 0
        %554 = vmatpush2.bf16.msra.mxu0 0
        %555 = vmatprep.subr.bf16.mxu0 0
        %556 = vmatpush2.bf16.msra.mxu0 0
        %557 = vmatprep.subr.bf16.mxu0 0
        %558 = vmatpush2.bf16.msra.mxu0 0
        %559 = vmatprep.subr.bf16.mxu0 0
        %560 = vmatpush2.bf16.msra.mxu0 0
        %561 = vmatprep.subr.bf16.mxu0 0
        %562 = vmatpush2.bf16.msra.mxu0 0
        %563 = vmatprep.subr.bf16.mxu0 0
        %564 = vmatpush2.bf16.msra.mxu0 0
        %565 = vmatprep.subr.bf16.mxu0 0
        %566 = vmatpush2.bf16.msra.mxu0 0
        %567 = vmatprep.subr.bf16.mxu0 0
        %568 = vmatpush2.bf16.msra.mxu0 0
        %569 = vmatprep.mubr.bf16.mxu0 0
        %570 = vmatmul.mubr.bf16.gmra.mxu0 %v472
        %v571 = vpop.f32.mrf.mxu0
        %v572 = vadd.f32 0.0, %v571
        %v573 = vpop.f32.mrf.mxu0
        %v574 = vpop.f32.mrf.mxu0
        %v575 = vpop.f32.mrf.mxu0
        %576 = vdwg.mxu0
        %v577 = vadd.f32 %v471, %v572
        %578 = vst [vmem:[#allocation2] sm:$0xff] %v577
        %p579 = scmp.eq.s32.totalorder %s30, 1
        // Predicated region
        $region57: #{tpu_custom_call.1} parent=39 // pred_check
          %p580 = pneg %p579
        $region58: #{tpu_custom_call.1} parent=39 // pred_check_branch
          %582 = sbr.rel (%p580) target = $region60
        $region59: #{tpu_custom_call.1} parent=39 // pred_region
          %v583 = vld [vmem:[#allocation2] sm:$0xff]
          %v584 = vld [vmem:[%s4] sm:$0x1]
          %v586 = vlaneseq
          %v587 = vshrl.u32 %v586, 7
          %v588 = vsub.s32 0, %v587
          %v589 = vrot.slane %v584, %v588
          %v591 = vadd.f32 %v583, %v589
          %592 = vst [vmem:[%s338] sm:$0xff] %v591
        $region60: #{tpu_custom_call.1} parent=39 // pred_fallthru
          _
        %s593 = sand.u32 %s170, 1
        %s594 = scalar_lea.sflag [#allocation5], %s593
        %s595 = sand.u32 %s170, 1
        %s596 = smul.addr %s595, 8
        %s597 = scalar_lea.vmem [#allocation9], %s596
        // Predicated region
        $region61: #{tpu_custom_call.1} parent=39 // pred_check
          %p598 = pneg %p180
        $region62: #{tpu_custom_call.1} parent=39 // pred_check_branch
          %600 = sbr.rel (%p598) target = $region64
        $region63: #{tpu_custom_call.1} parent=39 // pred_region
          %s602 = ssub.s32 128, 128
          %603 = vsyncadd %s594, %s602
          %s604 = smul.addr %s29, 128
          %s605 = scalar_lea.hbm %s5, %s604
          %s607 = sshll.u32 %s597, 4
          %s608 = int_to_ptr.vmem [resolvable:$true] %s607
          %610 = dma.vmem_to_hbm [thread:$0]  %s608, 128, %s605, %s594
        $region64: #{tpu_custom_call.1} parent=39 // pred_fallthru
          _
      $region40: #{tpu_custom_call.1} parent=5 // pred_fallthru
        _
      %p611 = scmp.le.s32.totalorder 2, %s20
      // Predicated region
      $region65: #{tpu_custom_call.1} parent=5 // pred_check
        %p612 = pneg %p611
      $region66: #{tpu_custom_call.1} parent=5 // pred_check_branch
        %614 = sbr.rel (%p612) target = $region68
      $region67: #{tpu_custom_call.1} parent=5 // pred_region
        %s615 = ssub.s32 %s20, 2
        // Predicated region
        $region69: #{tpu_custom_call.1} parent=67 // pred_check
          %p616 = pneg %p186
        $region70: #{tpu_custom_call.1} parent=67 // pred_check_branch
          %618 = sbr.rel (%p616) target = $region72
        $region71: #{tpu_custom_call.1} parent=67 // pred_region
          %s619 = sand.u32 %s171, 1
          %s620 = scalar_lea.sflag [#allocation5], %s619
          %s621 = sand.u32 %s171, 1
          %s622 = smul.addr %s621, 8
          %s623 = scalar_lea.vmem [#allocation9], %s622
          %624 = dma.done %s620, 128
        $region72: #{tpu_custom_call.1} parent=67 // pred_fallthru
          _
      $region68: #{tpu_custom_call.1} parent=5 // pred_fallthru
        _
    $region6: #{tpu_custom_call.1} parent=1 // loop_footer
      %s24 = sadd.s32 1, %s20
    $region7: #{tpu_custom_call.1} parent=1 // loop_footer_branch
      %19 = sbr.rel target = $region3
    $region8: #{tpu_custom_call.1} parent=1 // loop_exit
      _
    %625 = vsyncpa [#allocation4], 1
    %s626 = scalar_lea.sflag [#allocation4], 1
    %627 = vsyncpa %s626, 1
    %628 = vsyncpa [#allocation7], 1
    %s629 = scalar_lea.sflag [#allocation7], 1
    %630 = vsyncpa %s629, 1
    %631 = vsyncpa [#allocation5], 1
    %s632 = scalar_lea.sflag [#allocation5], 1
    %633 = vsyncpa %s632, 1

</llo_original>
